<compile_context>
chip_gen: v7x
topology: tpu7x:2x2x1
jax: 0.10.0
libtpu: 0.0.40
codegen_flags: <defaults>
</compile_context>

<pallas_src>
import functools

import jax
import jax.numpy as jnp
from jax.experimental import pallas as pl
from jax.experimental.pallas import tpu as pltpu

EPS = 1e-5
LANE = 128
M_ALIGN = 256                         # M padded to this granule (bounded dead rows)
DEFAULT_TILE_M = 512                  # multiple of M_ALIGN; raise to 1024 on v6e/v5e
VMEM_LIMIT_BYTES = 64 * 1024 * 1024   # safe on v7x (64 MiB phys); raise to 96-128 MiB on v5e/v6e


def _round_up(x, m):
    return (x + m - 1) // m * m


def _pad2(a, rows, cols):
    return jnp.pad(a, ((0, rows - a.shape[0]), (0, cols - a.shape[1])))


def _pad_row(v, cp):
    return _pad2(v.reshape(1, -1).astype(jnp.float32), 1, cp)


def _mosaic(*sem):
    return pltpu.CompilerParams(dimension_semantics=sem,
                                vmem_limit_bytes=VMEM_LIMIT_BYTES)


# ----------------------------------------------------------------------------- kernels

def _matmul_stats_kernel(cols_ref, w_ref, y_ref, stats_ref):
    """Single conv pass: y_tile = cols_tile @ w (bf16 writeback) + resident (sum, sumsq)."""
    @pl.when(pl.program_id(0) == 0)
    def _init():
        stats_ref[...] = jnp.zeros_like(stats_ref)

    y = jnp.dot(cols_ref[...], w_ref[...], preferred_element_type=jnp.float32)
    yb = y.astype(jnp.bfloat16)
    y_ref[...] = yb
    # Stats describe exactly the bf16 values the epilogue will normalize (self-consistent BN).
    yf = yb.astype(jnp.float32)
    stats_ref[...] = stats_ref[...] + jnp.concatenate(
        [jnp.sum(yf, axis=0, keepdims=True),
         jnp.sum(yf * yf, axis=0, keepdims=True)], axis=0)


def _bn_act_kernel(y_ref, scale_ref, shift_ref, out_ref, *, apply_relu):
    """Elementwise epilogue: out = [relu](y * scale + shift)."""
    out = y_ref[...].astype(jnp.float32) * scale_ref[...] + shift_ref[...]
    if apply_relu:
        out = jnp.maximum(out, 0.0)
    out_ref[...] = out.astype(out_ref.dtype)


def _bn_idskip_kernel(y_ref, scale_ref, shift_ref, idn_ref, out_ref):
    """Elementwise epilogue (identity skip): out = relu(y * scale + shift + identity)."""
    out = (y_ref[...].astype(jnp.float32) * scale_ref[...] + shift_ref[...]
           + idn_ref[...])
    out_ref[...] = jnp.maximum(out, 0.0).astype(out_ref.dtype)


def _bn_convskip_kernel(y_ref, scale_ref, shift_ref, ys_ref, scales_ref, shifts_ref,
                        out_ref):
    """Elementwise epilogue (1x1-conv skip): out = relu(BN(y) + BN(y_skip))."""
    main = y_ref[...].astype(jnp.float32) * scale_ref[...] + shift_ref[...]
    skip = ys_ref[...].astype(jnp.float32) * scales_ref[...] + shifts_ref[...]
    out_ref[...] = jnp.maximum(main + skip, 0.0).astype(out_ref.dtype)


# ----------------------------------------------------------------------------- wrappers

def _tile_spec(tile_m, cols):
    return pl.BlockSpec((tile_m, cols), lambda i: (i, 0))


def _const_spec(shape):
    # NOTE(v7x): when VMEM is tight (64 MiB/TC) these resident operands (weights, scale,
    # shift) can be single-buffered via pipeline_mode=pl.Buffered(1) to free several MiB.
    return pl.BlockSpec(shape, lambda i: (0, 0))


def conv_matmul_stats(cols, w, tile_m):
    """One pass per conv: per-tile pre-BN y (bf16) + per-channel (sum, sumsq) in f32."""
    mp, kp = cols.shape
    cp = w.shape[1]
    return pl.pallas_call(
        _matmul_stats_kernel,
        out_shape=(jax.ShapeDtypeStruct((mp, cp), jnp.bfloat16),
                   jax.ShapeDtypeStruct((2, cp), jnp.float32)),
        grid_spec=pltpu.PrefetchScalarGridSpec(
            num_scalar_prefetch=0,
            grid=(mp // tile_m,),
            in_specs=[_tile_spec(tile_m, kp), _const_spec((kp, cp))],
            out_specs=(_tile_spec(tile_m, cp), _const_spec((2, cp)))),
        # "arbitrary": the stats output is a resident accumulator across the M axis.
        # NOTE(v7x): a leading size-2 "parallel" axis with per-core partial stats (combined
        # in XLA) would split this pass across the two TensorCores.
        compiler_params=_mosaic("arbitrary"),
    )(cols, w)


def bn_act(y, scale, shift, *, apply_relu, out_dtype, tile_m):
    mp, cp = y.shape
    kern = functools.partial(_bn_act_kernel, apply_relu=apply_relu)
    return pl.pallas_call(
        kern,
        out_shape=jax.ShapeDtypeStruct((mp, cp), out_dtype),
        grid_spec=pltpu.PrefetchScalarGridSpec(
            num_scalar_prefetch=0,
            grid=(mp // tile_m,),
            in_specs=[_tile_spec(tile_m, cp), _const_spec((1, cp)), _const_spec((1, cp))],
            out_specs=_tile_spec(tile_m, cp)),
        compiler_params=_mosaic("parallel"),
    )(y, scale, shift)


def bn_idskip_add_relu(y, scale, shift, idn, *, tile_m):
    mp, cp = y.shape
    return pl.pallas_call(
        _bn_idskip_kernel,
        out_shape=jax.ShapeDtypeStruct((mp, cp), jnp.float32),
        grid_spec=pltpu.PrefetchScalarGridSpec(
            num_scalar_prefetch=0,
            grid=(mp // tile_m,),
            in_specs=[_tile_spec(tile_m, cp), _const_spec((1, cp)), _const_spec((1, cp)),
                      _tile_spec(tile_m, cp)],
            out_specs=_tile_spec(tile_m, cp)),
        compiler_params=_mosaic("parallel"),
    )(y, scale, shift, idn)


def bn_convskip_add_relu(y, scale, shift, ys, scales, shifts, *, tile_m):
    mp, cp = y.shape
    return pl.pallas_call(
        _bn_convskip_kernel,
        out_shape=jax.ShapeDtypeStruct((mp, cp), jnp.float32),
        grid_spec=pltpu.PrefetchScalarGridSpec(
            num_scalar_prefetch=0,
            grid=(mp // tile_m,),
            in_specs=[_tile_spec(tile_m, cp), _const_spec((1, cp)), _const_spec((1, cp)),
                      _tile_spec(tile_m, cp), _const_spec((1, cp)), _const_spec((1, cp))],
            out_specs=_tile_spec(tile_m, cp)),
        compiler_params=_mosaic("parallel"),
    )(y, scale, shift, ys, scales, shifts)


# ----------------------------------------------------------------------------- glue

def _bn_scale_shift(stats, g, be, m_valid):
    """Per-channel (1,Cp) scale/shift so BN(y) == y*scale + shift (training mode)."""
    inv = 1.0 / m_valid
    mean = stats[0:1, :] * inv
    var = jnp.maximum(stats[1:2, :] * inv - mean * mean, 0.0)   # clamp cancellation noise
    scale = jax.lax.rsqrt(var + EPS) * g
    shift = be - mean * scale
    return scale, shift


def im2col(x_nhwc, ksize, stride, pad):
    """Extract (ky, kx, cin)-ordered patches.  Pure-JAX glue (no compute), dtype-preserving."""
    N, H, W, C = x_nhwc.shape
    xp = jnp.pad(x_nhwc, ((0, 0), (pad, pad), (pad, pad), (0, 0)))
    Ho = (H + 2 * pad - ksize) // stride + 1
    Wo = (W + 2 * pad - ksize) // stride + 1
    patches = []
    for ky in range(ksize):
        for kx in range(ksize):
            patches.append(xp[:, ky:ky + stride * Ho:stride, kx:kx + stride * Wo:stride, :])
    cols = jnp.stack(patches, axis=3)                     # (N, Ho, Wo, k*k, C)
    return cols.reshape(N * Ho * Wo, ksize * ksize * C), (N, Ho, Wo)


def _choose_tiling(M, tile_m):
    """Pad M to a 256-row granule; pick the largest tile (multiple of 256) dividing it."""
    tile_m = max(M_ALIGN, _round_up(tile_m, M_ALIGN))
    Mp = _round_up(M, M_ALIGN)
    tm = min(tile_m, Mp)
    while Mp % tm != 0:          # M_ALIGN divides Mp, so this terminates at >= M_ALIGN
        tm -= M_ALIGN
    return Mp, tm


def init_residual_block_params(key, in_channels, out_channels, downsample):
    """Deterministic synthetic parameters (conv weights stored HWIO)."""
    ks = jax.random.split(key, 12)
    p = {
        "w1": 0.1 * jax.random.normal(ks[0], (3, 3, in_channels, out_channels), jnp.float32),
        "b1": 0.1 * jax.random.normal(ks[1], (out_channels,), jnp.float32),
        "g1": 1.0 + 0.1 * jax.random.normal(ks[2], (out_channels,), jnp.float32),
        "be1": 0.1 * jax.random.normal(ks[3], (out_channels,), jnp.float32),
        "w2": 0.1 * jax.random.normal(ks[4], (3, 3, out_channels, out_channels), jnp.float32),
        "b2": 0.1 * jax.random.normal(ks[5], (out_channels,), jnp.float32),
        "g2": 1.0 + 0.1 * jax.random.normal(ks[6], (out_channels,), jnp.float32),
        "be2": 0.1 * jax.random.normal(ks[7], (out_channels,), jnp.float32),
    }
    if downsample or in_channels != out_channels:
        p.update({
            "ws": 0.1 * jax.random.normal(ks[8], (1, 1, in_channels, out_channels), jnp.float32),
            "bs": 0.1 * jax.random.normal(ks[9], (out_channels,), jnp.float32),
            "gs": 1.0 + 0.1 * jax.random.normal(ks[10], (out_channels,), jnp.float32),
            "bes": 0.1 * jax.random.normal(ks[11], (out_channels,), jnp.float32),
        })
    return p


def residual_block_forward(x_nchw, params, downsample, tile_m=DEFAULT_TILE_M):
    """Pallas-backed forward.  Input/output are NCHW like the PyTorch module.

    Conv biases (b1/b2/bs) are intentionally dropped: a per-channel constant before
    training-mode BatchNorm is exactly cancelled by the mean subtraction.
    """
    x = jnp.transpose(x_nchw, (0, 2, 3, 1)).astype(jnp.float32)   # -> NHWC (f32, identity path)
    xb = x.astype(jnp.bfloat16)                                   # bf16 activation streaming
    stride = 2 if downsample else 1
    _, _, _, Cin = x.shape
    Cout = params["w1"].shape[-1]
    Cp = _round_up(Cout, LANE)

    # main path: conv1 (matmul + stats fused) -> BN scale/shift (XLA) -> relu epilogue (bf16)
    cols1, (N, Ho, Wo) = im2col(xb, 3, stride, 1)                 # bf16 (M, 9*Cin)
    M = N * Ho * Wo
    Mp, tm = _choose_tiling(M, tile_m)

    K1p = _round_up(9 * Cin, LANE)
    cols1p = _pad2(cols1, Mp, K1p)
    w1p = _pad2(params["w1"].reshape(9 * Cin, Cout), K1p, Cp).astype(jnp.bfloat16)
    y1, stats1 = conv_matmul_stats(cols1p, w1p, tm)
    sc1, sh1 = _bn_scale_shift(stats1, _pad_row(params["g1"], Cp),
                               _pad_row(params["be1"], Cp), M)
    h1 = bn_act(y1, sc1, sh1, apply_relu=True, out_dtype=jnp.bfloat16, tile_m=tm)
    h1_nhwc = h1[:M, :Cout].reshape(N, Ho, Wo, Cout)

    # main path: conv2 (matmul + stats fused)
    # TODO(synk): replace the materialized im2col with in-kernel 9-tap shifted-window DMA
    # accumulation (halo block per M-tile) to remove the 9x cols expansion in HBM.
    cols2, _ = im2col(h1_nhwc, 3, 1, 1)                           # bf16 (M, 9*Cout)
    K2p = _round_up(9 * Cout, LANE)
    cols2p = _pad2(cols2, Mp, K2p)
    w2p = _pad2(params["w2"].reshape(9 * Cout, Cout), K2p, Cp).astype(jnp.bfloat16)
    y2, stats2 = conv_matmul_stats(cols2p, w2p, tm)
    sc2, sh2 = _bn_scale_shift(stats2, _pad_row(params["g2"], Cp),
                               _pad_row(params["be2"], Cp), M)

    if "ws" in params:
        # 1x1-conv + BN skip: one matmul+stats pass, then fused two-BN add+relu epilogue.
        cols_s, _ = im2col(xb, 1, stride, 0)                      # bf16 (M, Cin)
        Ksp = _round_up(Cin, LANE)
        cols_sp = _pad2(cols_s, Mp, Ksp)
        wsp = _pad2(params["ws"].reshape(Cin, Cout), Ksp, Cp).astype(jnp.bfloat16)
        ys, stats_s = conv_matmul_stats(cols_sp, wsp, tm)
        scs, shs = _bn_scale_shift(stats_s, _pad_row(params["gs"], Cp),
                                   _pad_row(params["bes"], Cp), M)
        out = bn_convskip_add_relu(y2, sc2, sh2, ys, scs, shs, tile_m=tm)
    else:
        # identity skip — valid because no-'ws' implies Cin == Cout and stride == 1
        idn = _pad2(x.reshape(M, Cin), Mp, Cp)                    # f32, added post-BN
        out = bn_idskip_add_relu(y2, sc2, sh2, idn, tile_m=tm)

    out_nhwc = out[:M, :Cout].reshape(N, Ho, Wo, Cout)
    return jnp.transpose(out_nhwc, (0, 3, 1, 2))                  # -> NCHW


# ----------------------------------------------------------------------------- reference

def _conv_ref(x_nhwc, w_hwio, b, stride, pad):
    y = jax.lax.conv_general_dilated(
        x_nhwc, w_hwio, (stride, stride), [(pad, pad), (pad, pad)],
        dimension_numbers=("NHWC", "HWIO", "NHWC"))
    return y if b is None else y + b


def _bn_ref(y, g, be):
    m = y.mean(axis=(0, 1, 2), keepdims=True)
    v = ((y - m) ** 2).mean(axis=(0, 1, 2), keepdims=True)
    return (y - m) / jnp.sqrt(v + EPS) * g + be


def residual_block_reference(x_nchw, params, downsample, *, mixed_precision):
    """References.

    mixed_precision=False: PyTorch-faithful f32 reference (training-mode BN, conv bias kept —
    training-mode BN cancels it, which the comparison proves within tolerance).
    mixed_precision=True: mirrors the kernel's pipeline (bf16 matmul operands with f32
    accumulation, bf16 pre-BN activations and bf16 h1, bias dropped) for a tight comparison.
    """
    x = jnp.transpose(x_nchw, (0, 2, 3, 1)).astype(jnp.float32)
    stride = 2 if downsample else 1
    if mixed_precision:
        rt = lambda a: a.astype(jnp.bfloat16).astype(jnp.float32)
        y1 = rt(_conv_ref(rt(x), rt(params["w1"]), None, stride, 1))
        h = rt(jnp.maximum(_bn_ref(y1, params["g1"], params["be1"]), 0.0))
        y2 = rt(_conv_ref(h, rt(params["w2"]), None, 1, 1))
        h2 = _bn_ref(y2, params["g2"], params["be2"])
        if "ws" in params:
            ysk = rt(_conv_ref(rt(x), rt(params["ws"]), None, stride, 0))
            idn = _bn_ref(ysk, params["gs"], params["bes"])
        else:
            idn = x
    else:
        h = _conv_ref(x, params["w1"], params["b1"], stride, 1)
        h = jnp.maximum(_bn_ref(h, params["g1"], params["be1"]), 0.0)
        h2 = _bn_ref(_conv_ref(h, params["w2"], params["b2"], 1, 1),
                     params["g2"], params["be2"])
        if "ws" in params:
            idn = _bn_ref(_conv_ref(x, params["ws"], params["bs"], stride, 0),
                          params["gs"], params["bes"])
        else:
            idn = x
    out = jnp.maximum(h2 + idn, 0.0)
    return jnp.transpose(out, (0, 3, 1, 2))


# ----------------------------------------------------------------------------- main

if __name__ == "__main__":
    key = jax.random.PRNGKey(0)
    kx, kp1, kp2 = jax.random.split(key, 3)

    x = jax.random.normal(kx, (2, 4, 16, 16), jnp.float32)        # NCHW, like PyTorch

    # config 1: downsample + channel change (skip = 1x1 conv + BN, fused epilogue)
    params_a = init_residual_block_params(kp1, in_channels=4, out_channels=8, downsample=True)
    out_a = residual_block_forward(x, params_a, downsample=True)
    jax.block_until_ready(out_a)
    assert out_a.shape == (2, 8, 8, 8)
    ref_a_mx = residual_block_reference(x, params_a, True, mixed_precision=True)
    ref_a_f32 = residual_block_reference(x, params_a, True, mixed_precision=False)
    assert jnp.allclose(out_a, ref_a_mx, rtol=1e-2, atol=1e-2), "mismatch vs mixed-precision ref (skip-conv)"
    assert jnp.allclose(out_a, ref_a_f32, rtol=5e-2, atol=5e-2), "mismatch vs f32 ref (skip-conv)"

    # config 2: identity skip (in == out channels, no downsample)
    params_b = init_residual_block_params(kp2, in_channels=4, out_channels=4, downsample=False)
    out_b = residual_block_forward(x, params_b, downsample=False)
    jax.block_until_ready(out_b)
    assert out_b.shape == (2, 4, 16, 16)
    ref_b_mx = residual_block_reference(x, params_b, False, mixed_precision=True)
    ref_b_f32 = residual_block_reference(x, params_b, False, mixed_precision=False)
    assert jnp.allclose(out_b, ref_b_mx, rtol=1e-2, atol=1e-2), "mismatch vs mixed-precision ref (identity)"
    assert jnp.allclose(out_b, ref_b_f32, rtol=5e-2, atol=5e-2), "mismatch vs f32 ref (identity)"

    print("KERNEL_OK")
</pallas_src>

<mosaic_0001>
module attributes {stable_mosaic.version = 11 : i64} {
  func.func @_matmul_stats_kernel(%arg0: i32, %arg1: memref<256x128xbf16, #tpu.memory_space<vmem>>, %arg2: memref<128x128xbf16, #tpu.memory_space<vmem>>, %arg3: memref<256x128xbf16, #tpu.memory_space<vmem>>, %arg4: memref<2x128xf32, #tpu.memory_space<vmem>>) attributes {dimension_semantics = [#tpu.dimension_semantics<arbitrary>], iteration_bounds = array<i64: 1>, scalar_prefetch = 0 : i64, scratch_operands = 0 : i64, tpu.core_type = #tpu.core_type<tc>, window_params = [{transform_indices = @transform_0, window_bounds = array<i64: 256, 128>}, {pipeline_mode = #tpu.pipeline_mode<synchronous>, transform_indices = @transform_1, window_bounds = array<i64: 128, 128>}, {transform_indices = @transform_2, window_bounds = array<i64: 256, 128>}, {pipeline_mode = #tpu.pipeline_mode<synchronous>, transform_indices = @transform_3, window_bounds = array<i64: 2, 128>}]} {
    %c0_i32 = arith.constant 0 : i32
    %0 = arith.cmpi eq, %arg0, %c0_i32 : i32
    %1 = arith.extui %0 : i1 to i32
    %c0_i32_0 = arith.constant 0 : i32
    %2 = arith.cmpi ne, %1, %c0_i32_0 : i32
    scf.if %2 {
      %cst_12 = arith.constant 0.000000e+00 : f32
      %18 = vector.broadcast %cst_12 : f32 to vector<2x128xf32>
      %c0_13 = arith.constant 0 : index
      %c0_14 = arith.constant 0 : index
      %19 = vector.load %arg4[%c0_13, %c0_14] : memref<2x128xf32, #tpu.memory_space<vmem>>, vector<2x128xf32>
      tpu.vector_store %arg4[%c0_13, %c0_14], %18 {strides = array<i32>} : memref<2x128xf32, #tpu.memory_space<vmem>>, vector<2x128xf32>,
    } else {
    }
    %c0 = arith.constant 0 : index
    %c0_1 = arith.constant 0 : index
    %3 = vector.load %arg1[%c0, %c0_1] : memref<256x128xbf16, #tpu.memory_space<vmem>>, vector<256x128xbf16>
    %c0_2 = arith.constant 0 : index
    %c0_3 = arith.constant 0 : index
    %4 = vector.load %arg2[%c0_2, %c0_3] : memref<128x128xbf16, #tpu.memory_space<vmem>>, vector<128x128xbf16>
    %cst = arith.constant dense<0.000000e+00> : vector<256x128xf32>
    %5 = tpu.matmul %3, %4, %cst {dimension_numbers = #tpu.dot_dimension_numbers<[1], [0], [0], [1], [0, 0, 1, 1], [], []>} : vector<256x128xbf16>, vector<128x128xbf16>, vector<256x128xf32> -> vector<256x128xf32>
    %6 = arith.truncf %5 : vector<256x128xf32> to vector<256x128xbf16>
    %c0_4 = arith.constant 0 : index
    %c0_5 = arith.constant 0 : index
    %7 = vector.load %arg3[%c0_4, %c0_5] : memref<256x128xbf16, #tpu.memory_space<vmem>>, vector<256x128xbf16>
    tpu.vector_store %arg3[%c0_4, %c0_5], %6 {strides = array<i32>} : memref<256x128xbf16, #tpu.memory_space<vmem>>, vector<256x128xbf16>,
    %8 = arith.extf %6 : vector<256x128xbf16> to vector<256x128xf32>
    %c0_6 = arith.constant 0 : index
    %c0_7 = arith.constant 0 : index
    %9 = vector.load %arg4[%c0_6, %c0_7] : memref<2x128xf32, #tpu.memory_space<vmem>>, vector<2x128xf32>
    %cst_8 = arith.constant dense<0.000000e+00> : vector<128xf32>
    %10 = vector.multi_reduction <add>, %8, %cst_8 [0] : vector<256x128xf32> to vector<128xf32>
    %11 = vector.shape_cast %10 : vector<128xf32> to vector<1x128xf32>
    %12 = arith.mulf %8, %8 : vector<256x128xf32>
    %cst_9 = arith.constant dense<0.000000e+00> : vector<128xf32>
    %13 = vector.multi_reduction <add>, %12, %cst_9 [0] : vector<256x128xf32> to vector<128xf32>
    %14 = vector.shape_cast %13 : vector<128xf32> to vector<1x128xf32>
    %15 = tpu.concatenate %11, %14 in 0 : vector<1x128xf32>, vector<1x128xf32> -> vector<2x128xf32>
    %16 = arith.addf %9, %15 : vector<2x128xf32>
    %c0_10 = arith.constant 0 : index
    %c0_11 = arith.constant 0 : index
    %17 = vector.load %arg4[%c0_10, %c0_11] : memref<2x128xf32, #tpu.memory_space<vmem>>, vector<2x128xf32>
    tpu.vector_store %arg4[%c0_10, %c0_11], %16 {strides = array<i32>} : memref<2x128xf32, #tpu.memory_space<vmem>>, vector<2x128xf32>,
    return
  }
  func.func @transform_0(%arg0: i32) -> (i32, i32) {
    %c0_i32 = arith.constant 0 : i32
    %c0_i32_0 = arith.constant 0 : i32
    return %arg0, %c0_i32 : i32, i32
  }
  func.func @transform_1(%arg0: i32) -> (i32, i32) {
    %c0_i32 = arith.constant 0 : i32
    %c0_i32_0 = arith.constant 0 : i32
    %c0_i32_1 = arith.constant 0 : i32
    return %c0_i32, %c0_i32_0 : i32, i32
  }
  func.func @transform_2(%arg0: i32) -> (i32, i32) {
    %c0_i32 = arith.constant 0 : i32
    %c0_i32_0 = arith.constant 0 : i32
    return %arg0, %c0_i32 : i32, i32
  }
  func.func @transform_3(%arg0: i32) -> (i32, i32) {
    %c0_i32 = arith.constant 0 : i32
    %c0_i32_0 = arith.constant 0 : i32
    %c0_i32_1 = arith.constant 0 : i32
    return %c0_i32, %c0_i32_0 : i32, i32
  }
}

</mosaic_0001>

<llo_original>
// kernel: tpu_custom_call.1
$region0: #{tpu_custom_call.1}
  #allocation0 [shape = 'u32[]', space=smem, size = 0x4, offset = 0x4, fixed_abs, tag = 'smem constant byte address 0x4 - core index']
  #allocation1 [shape = 'u32[144,128]{1,0:T(1,128)}', space=vmem, size = 0x12000, scoped, tag = 'internal scratch']
  %s0 = inlined_call_operand.hbm [shape: bf16[256,128], index: 0, kind: input, shape index: {}]
  %s1 = inlined_call_operand.hbm [shape: bf16[128,128], index: 1, kind: input, shape index: {}]
  %s2 = inlined_call_operand.hbm [shape: bf16[256,128], index: 2, kind: output, shape index: {0}]
  %s3 = inlined_call_operand.hbm [shape: f32[2,128], index: 3, kind: output, shape index: {1}]
  %4 = xla_tuple %s2, %s3
  %s5 = sld [smem:[#allocation0]]
  $region38: #{tpu_custom_call.1} parent=0
    _
  %s7 = ssub.s32 1, %s5
  %s8 = scalar_select 0, %s7, %s5
  $region1: #{tpu_custom_call.1} parent=0
    #allocation2 [shape = 'u8[65536]{0}', space=vmem, size = 0x10000, scoped, tag = 'input window, operand 0, single buffered']
    #allocation3 [shape = 's32[1]{0}', space=sflag, size = 0x4, scoped, tag = 'scoped memory for tpu_custom_call.1']
    #allocation4 [shape = 's32[1]{0}', space=sflag, size = 0x4, scoped, tag = 'scoped memory for tpu_custom_call.1']
    #allocation5 [shape = 'u8[32768]{0}', space=vmem, size = 0x8000, scoped, tag = 'input window, operand 1, single buffered']
    #allocation6 [shape = 's32[1]{0}', space=sflag, size = 0x4, scoped, tag = 'scoped memory for tpu_custom_call.1']
    #allocation7 [shape = 'u8[65536]{0}', space=vmem, size = 0x10000, scoped, tag = 'output window, operand 0, single buffered']
    #allocation8 [shape = 'u8[1024]{0}', space=vmem, size = 0x400, scoped, tag = 'output window, operand 1, single buffered']
    #allocation9 [shape = 's32[1]{0}', space=sflag, size = 0x4, scoped, tag = 'scoped memory for tpu_custom_call.1']
    %9 = vsyncpa [#allocation3], 0
    %10 = vsyncpa [#allocation6], 0
    %11 = vsyncpa [#allocation4], 0
    %12 = vsyncpa [#allocation9], 0
    // Predicated region
    $region2: #{tpu_custom_call.1} parent=1 // pred_check
      _
    $region3: #{tpu_custom_call.1} parent=1 // pred_check_branch
      %14 = sbr.rel (0) target = $region5
    $region4: #{tpu_custom_call.1} parent=1 // pred_region
      %s16 = ssub.s32 2048, 2048
      %17 = vsyncadd [#allocation3], %s16
      %s18 = sshll.u32 [#allocation2], 4
      %s19 = int_to_ptr.vmem [resolvable:$true] %s18
      %24 = dma.hbm_to_vmem [thread:$0]  %s0, 2048, %s19, [#allocation3], 64, 64, 4
    $region5: #{tpu_custom_call.1} parent=1 // pred_fallthru
      _
    // Predicated region
    $region6: #{tpu_custom_call.1} parent=1 // pred_check
      _
    $region7: #{tpu_custom_call.1} parent=1 // pred_check_branch
      %26 = sbr.rel (0) target = $region9
    $region8: #{tpu_custom_call.1} parent=1 // pred_region
      %s28 = ssub.s32 1024, 1024
      %29 = vsyncadd [#allocation6], %s28
      %s30 = sshll.u32 [#allocation5], 4
      %s31 = int_to_ptr.vmem [resolvable:$true] %s30
      %36 = dma.hbm_to_vmem [thread:$0]  %s1, 1024, %s31, [#allocation6], 64, 64, 4
    $region9: #{tpu_custom_call.1} parent=1 // pred_fallthru
      _
    // Predicated region
    $region10: #{tpu_custom_call.1} parent=1 // pred_check
      _
    $region11: #{tpu_custom_call.1} parent=1 // pred_check_branch
      %38 = sbr.rel (0) target = $region13
    $region12: #{tpu_custom_call.1} parent=1 // pred_region
      %39 = dma.done [#allocation3], 2048
    $region13: #{tpu_custom_call.1} parent=1 // pred_fallthru
      _
    // Predicated region
    $region14: #{tpu_custom_call.1} parent=1 // pred_check
      _
    $region15: #{tpu_custom_call.1} parent=1 // pred_check_branch
      %41 = sbr.rel (0) target = $region17
    $region16: #{tpu_custom_call.1} parent=1 // pred_region
      %42 = dma.done [#allocation6], 1024
    $region17: #{tpu_custom_call.1} parent=1 // pred_fallthru
      _
    %p44 = scmp.eq.s32.totalorder 0, 0
    // Predicated region
    $region18: #{tpu_custom_call.1} parent=1 // pred_check
      %p45 = pneg %p44
    $region19: #{tpu_custom_call.1} parent=1 // pred_check_branch
      %47 = sbr.rel (%p45) target = $region21
    $region20: #{tpu_custom_call.1} parent=1 // pred_region
      %48 = vst [vmem:[#allocation8] sm:$0x3] 0.0
    $region21: #{tpu_custom_call.1} parent=1 // pred_fallthru
      _
    %v49 = vld [vmem:[#allocation2] sm:$0xf]
    %v50 = vld [vmem:[#allocation2 + $0x4] sm:$0xf]
    %v51 = vld [vmem:[#allocation2 + $0x8] sm:$0xf]
    %v52 = vld [vmem:[#allocation2 + $0xc] sm:$0xf]
    %v53 = vld [vmem:[#allocation2 + $0x10] sm:$0xf]
    %v54 = vld [vmem:[#allocation2 + $0x14] sm:$0xf]
    %v55 = vld [vmem:[#allocation2 + $0x18] sm:$0xf]
    %v56 = vld [vmem:[#allocation2 + $0x1c] sm:$0xf]
    %v57 = vld [vmem:[#allocation2 + $0x20] sm:$0xf]
    %v58 = vld [vmem:[#allocation2 + $0x24] sm:$0xf]
    %v59 = vld [vmem:[#allocation2 + $0x28] sm:$0xf]
    %v60 = vld [vmem:[#allocation2 + $0x2c] sm:$0xf]
    %v61 = vld [vmem:[#allocation2 + $0x30] sm:$0xf]
    %v62 = vld [vmem:[#allocation2 + $0x34] sm:$0xf]
    %v63 = vld [vmem:[#allocation2 + $0x38] sm:$0xf]
    %v64 = vld [vmem:[#allocation2 + $0x3c] sm:$0xf]
    %v65 = vld [vmem:[#allocation2 + $0x40] sm:$0xf]
    %v66 = vld [vmem:[#allocation2 + $0x44] sm:$0xf]
    %v67 = vld [vmem:[#allocation2 + $0x48] sm:$0xf]
    %v68 = vld [vmem:[#allocation2 + $0x4c] sm:$0xf]
    %v69 = vld [vmem:[#allocation2 + $0x50] sm:$0xf]
    %v70 = vld [vmem:[#allocation2 + $0x54] sm:$0xf]
    %v71 = vld [vmem:[#allocation2 + $0x58] sm:$0xf]
    %v72 = vld [vmem:[#allocation2 + $0x5c] sm:$0xf]
    %v73 = vld [vmem:[#allocation2 + $0x60] sm:$0xf]
    %v74 = vld [vmem:[#allocation2 + $0x64] sm:$0xf]
    %v75 = vld [vmem:[#allocation2 + $0x68] sm:$0xf]
    %v76 = vld [vmem:[#allocation2 + $0x6c] sm:$0xf]
    %v77 = vld [vmem:[#allocation2 + $0x70] sm:$0xf]
    %v78 = vld [vmem:[#allocation2 + $0x74] sm:$0xf]
    %v79 = vld [vmem:[#allocation2 + $0x78] sm:$0xf]
    %v80 = vld [vmem:[#allocation2 + $0x7c] sm:$0xf]
    %v81 = vld [vmem:[#allocation5] sm:$0xf]
    %v82 = vld [vmem:[#allocation5 + $0x4] sm:$0xf]
    %v83 = vld [vmem:[#allocation5 + $0x8] sm:$0xf]
    %v84 = vld [vmem:[#allocation5 + $0xc] sm:$0xf]
    %v85 = vld [vmem:[#allocation5 + $0x10] sm:$0xf]
    %v86 = vld [vmem:[#allocation5 + $0x14] sm:$0xf]
    %v87 = vld [vmem:[#allocation5 + $0x18] sm:$0xf]
    %v88 = vld [vmem:[#allocation5 + $0x1c] sm:$0xf]
    %v89 = vld [vmem:[#allocation5 + $0x20] sm:$0xf]
    %v90 = vld [vmem:[#allocation5 + $0x24] sm:$0xf]
    %v91 = vld [vmem:[#allocation5 + $0x28] sm:$0xf]
    %v92 = vld [vmem:[#allocation5 + $0x2c] sm:$0xf]
    %v93 = vld [vmem:[#allocation5 + $0x30] sm:$0xf]
    %v94 = vld [vmem:[#allocation5 + $0x34] sm:$0xf]
    %v95 = vld [vmem:[#allocation5 + $0x38] sm:$0xf]
    %v96 = vld [vmem:[#allocation5 + $0x3c] sm:$0xf]
    %v129 = vunpack.c.l.b16 %v49
    %v130 = vunpack.c.l.b16 %v50
    %v131 = vunpack.c.l.b16 %v51
    %v132 = vunpack.c.l.b16 %v52
    %v133 = vunpack.c.l.b16 %v53
    %v134 = vunpack.c.l.b16 %v54
    %v135 = vunpack.c.l.b16 %v55
    %v136 = vunpack.c.l.b16 %v56
    %v137 = vunpack.c.l.b16 %v57
    %v138 = vunpack.c.l.b16 %v58
    %v139 = vunpack.c.l.b16 %v59
    %v140 = vunpack.c.l.b16 %v60
    %v141 = vunpack.c.l.b16 %v61
    %v142 = vunpack.c.l.b16 %v62
    %v143 = vunpack.c.l.b16 %v63
    %v144 = vunpack.c.l.b16 %v64
    %v145 = vunpack.c.l.b16 %v65
    %v146 = vunpack.c.l.b16 %v66
    %v147 = vunpack.c.l.b16 %v67
    %v148 = vunpack.c.l.b16 %v68
    %v149 = vunpack.c.l.b16 %v69
    %v150 = vunpack.c.l.b16 %v70
    %v151 = vunpack.c.l.b16 %v71
    %v152 = vunpack.c.l.b16 %v72
    %v153 = vunpack.c.l.b16 %v73
    %v154 = vunpack.c.l.b16 %v74
    %v155 = vunpack.c.l.b16 %v75
    %v156 = vunpack.c.l.b16 %v76
    %v157 = vunpack.c.l.b16 %v77
    %v158 = vunpack.c.l.b16 %v78
    %v159 = vunpack.c.l.b16 %v79
    %v160 = vunpack.c.l.b16 %v80
    %v161 = vpack.c.b16 %v130, %v129
    %v162 = vpack.c.b16 %v132, %v131
    %v163 = vpack.c.b16 %v134, %v133
    %v164 = vpack.c.b16 %v136, %v135
    %v165 = vpack.c.b16 %v138, %v137
    %v166 = vpack.c.b16 %v140, %v139
    %v167 = vpack.c.b16 %v142, %v141
    %v168 = vpack.c.b16 %v144, %v143
    %v169 = vpack.c.b16 %v146, %v145
    %v170 = vpack.c.b16 %v148, %v147
    %v171 = vpack.c.b16 %v150, %v149
    %v172 = vpack.c.b16 %v152, %v151
    %v173 = vpack.c.b16 %v154, %v153
    %v174 = vpack.c.b16 %v156, %v155
    %v175 = vpack.c.b16 %v158, %v157
    %v176 = vpack.c.b16 %v160, %v159
    %v209 = vunpack.c.l.b16 %v81
    %v210 = vunpack.c.l.b16 %v82
    %v211 = vunpack.c.l.b16 %v83
    %v212 = vunpack.c.l.b16 %v84
    %v213 = vunpack.c.l.b16 %v85
    %v214 = vunpack.c.l.b16 %v86
    %v215 = vunpack.c.l.b16 %v87
    %v216 = vunpack.c.l.b16 %v88
    %v217 = vunpack.c.l.b16 %v89
    %v218 = vunpack.c.l.b16 %v90
    %v219 = vunpack.c.l.b16 %v91
    %v220 = vunpack.c.l.b16 %v92
    %v221 = vunpack.c.l.b16 %v93
    %v222 = vunpack.c.l.b16 %v94
    %v223 = vunpack.c.l.b16 %v95
    %v224 = vunpack.c.l.b16 %v96
    %v225 = vpack.c.b16 %v210, %v209
    %v226 = vpack.c.b16 %v212, %v211
    %v227 = vpack.c.b16 %v214, %v213
    %v228 = vpack.c.b16 %v216, %v215
    %v229 = vpack.c.b16 %v218, %v217
    %v230 = vpack.c.b16 %v220, %v219
    %v231 = vpack.c.b16 %v222, %v221
    %v232 = vpack.c.b16 %v224, %v223
    %241 = vmatprep.subr.bf16.mxu0 0
    %242 = vmatpush1.bf16.msra.mxu0 %v225
    %243 = vmatprep.subr.bf16.mxu0 0
    %244 = vmatpush1.bf16.msra.mxu0 %v226
    %245 = vmatprep.subr.bf16.mxu0 0
    %246 = vmatpush1.bf16.msra.mxu0 %v227
    %247 = vmatprep.subr.bf16.mxu0 0
    %248 = vmatpush1.bf16.msra.mxu0 %v228
    %249 = vmatprep.subr.bf16.mxu0 0
    %250 = vmatpush1.bf16.msra.mxu0 %v229
    %251 = vmatprep.subr.bf16.mxu0 0
    %252 = vmatpush1.bf16.msra.mxu0 %v230
    %253 = vmatprep.subr.bf16.mxu0 0
    %254 = vmatpush1.bf16.msra.mxu0 %v231
    %255 = vmatprep.subr.bf16.mxu0 0
    %256 = vmatpush1.bf16.msra.mxu0 %v232
    %257 = vmatprep.subr.bf16.mxu0 0
    %258 = vmatpush1.bf16.msra.mxu0 0
    %259 = vmatprep.subr.bf16.mxu0 0
    %260 = vmatpush1.bf16.msra.mxu0 0
    %261 = vmatprep.subr.bf16.mxu0 0
    %262 = vmatpush1.bf16.msra.mxu0 0
    %263 = vmatprep.subr.bf16.mxu0 0
    %264 = vmatpush1.bf16.msra.mxu0 0
    %265 = vmatprep.subr.bf16.mxu0 0
    %266 = vmatpush1.bf16.msra.mxu0 0
    %267 = vmatprep.subr.bf16.mxu0 0
    %268 = vmatpush1.bf16.msra.mxu0 0
    %269 = vmatprep.subr.bf16.mxu0 0
    %270 = vmatpush1.bf16.msra.mxu0 0
    %271 = vmatprep.subr.bf16.mxu0 0
    %272 = vmatpush1.bf16.msra.mxu0 0
    %273 = vmatprep.mubr.bf16.mxu0 0
    %274 = vmatmul.mubr.bf16.gmra.mrb[0].mxu0 %v161
    %v275 = vpop.f32.mrb[0].mxu0
    %v276 = vadd.f32 0.0, %v275
    %v277 = vpop.f32.mrb[0].mxu0
    %v278 = vpop.f32.mrb[0].mxu0
    %v279 = vadd.f32 0.0, %v278
    %v280 = vpop.f32.mrb[0].mxu0
    %281 = vmatprep.mubr.bf16.mxu0 0
    %282 = vmatmul.mubr.bf16.gmra.mrb[0].mxu0 %v162
    %v283 = vpop.f32.mrb[0].mxu0
    %v284 = vadd.f32 0.0, %v283
    %v285 = vpop.f32.mrb[0].mxu0
    %v286 = vpop.f32.mrb[0].mxu0
    %v287 = vadd.f32 0.0, %v286
    %v288 = vpop.f32.mrb[0].mxu0
    %289 = vmatprep.mubr.bf16.mxu0 0
    %290 = vmatmul.mubr.bf16.gmra.mrb[0].mxu0 %v163
    %v291 = vpop.f32.mrb[0].mxu0
    %v292 = vadd.f32 0.0, %v291
    %v293 = vpop.f32.mrb[0].mxu0
    %v294 = vpop.f32.mrb[0].mxu0
    %v295 = vadd.f32 0.0, %v294
    %v296 = vpop.f32.mrb[0].mxu0
    %297 = vmatprep.mubr.bf16.mxu0 0
    %298 = vmatmul.mubr.bf16.gmra.mrb[0].mxu0 %v164
    %v299 = vpop.f32.mrb[0].mxu0
    %v300 = vadd.f32 0.0, %v299
    %v301 = vpop.f32.mrb[0].mxu0
    %v302 = vpop.f32.mrb[0].mxu0
    %v303 = vadd.f32 0.0, %v302
    %v304 = vpop.f32.mrb[0].mxu0
    %305 = vmatprep.mubr.bf16.mxu0 0
    %306 = vmatmul.mubr.bf16.gmra.mrb[0].mxu0 %v165
    %v307 = vpop.f32.mrb[0].mxu0
    %v308 = vadd.f32 0.0, %v307
    %v309 = vpop.f32.mrb[0].mxu0
    %v310 = vpop.f32.mrb[0].mxu0
    %v311 = vadd.f32 0.0, %v310
    %v312 = vpop.f32.mrb[0].mxu0
    %313 = vmatprep.mubr.bf16.mxu0 0
    %314 = vmatmul.mubr.bf16.gmra.mrb[0].mxu0 %v166
    %v315 = vpop.f32.mrb[0].mxu0
    %v316 = vadd.f32 0.0, %v315
    %v317 = vpop.f32.mrb[0].mxu0
    %v318 = vpop.f32.mrb[0].mxu0
    %v319 = vadd.f32 0.0, %v318
    %v320 = vpop.f32.mrb[0].mxu0
    %321 = vmatprep.mubr.bf16.mxu0 0
    %322 = vmatmul.mubr.bf16.gmra.mrb[0].mxu0 %v167
    %v323 = vpop.f32.mrb[0].mxu0
    %v324 = vadd.f32 0.0, %v323
    %v325 = vpop.f32.mrb[0].mxu0
    %v326 = vpop.f32.mrb[0].mxu0
    %v327 = vadd.f32 0.0, %v326
    %v328 = vpop.f32.mrb[0].mxu0
    %329 = vmatprep.mubr.bf16.mxu0 0
    %330 = vmatmul.mubr.bf16.gmra.mrb[0].mxu0 %v168
    %v331 = vpop.f32.mrb[0].mxu0
    %v332 = vadd.f32 0.0, %v331
    %v333 = vpop.f32.mrb[0].mxu0
    %v334 = vpop.f32.mrb[0].mxu0
    %v335 = vadd.f32 0.0, %v334
    %v336 = vpop.f32.mrb[0].mxu0
    %337 = vmatprep.mubr.bf16.mxu0 0
    %338 = vmatmul.mubr.bf16.gmra.mrb[0].mxu0 %v169
    %v339 = vpop.f32.mrb[0].mxu0
    %v340 = vadd.f32 0.0, %v339
    %v341 = vpop.f32.mrb[0].mxu0
    %v342 = vpop.f32.mrb[0].mxu0
    %v343 = vadd.f32 0.0, %v342
    %v344 = vpop.f32.mrb[0].mxu0
    %345 = vmatprep.mubr.bf16.mxu0 0
    %346 = vmatmul.mubr.bf16.gmra.mrb[0].mxu0 %v170
    %v347 = vpop.f32.mrb[0].mxu0
    %v348 = vadd.f32 0.0, %v347
    %v349 = vpop.f32.mrb[0].mxu0
    %v350 = vpop.f32.mrb[0].mxu0
    %v351 = vadd.f32 0.0, %v350
    %v352 = vpop.f32.mrb[0].mxu0
    %353 = vmatprep.mubr.bf16.mxu0 0
    %354 = vmatmul.mubr.bf16.gmra.mrb[0].mxu0 %v171
    %v355 = vpop.f32.mrb[0].mxu0
    %v356 = vadd.f32 0.0, %v355
    %v357 = vpop.f32.mrb[0].mxu0
    %v358 = vpop.f32.mrb[0].mxu0
    %v359 = vadd.f32 0.0, %v358
    %v360 = vpop.f32.mrb[0].mxu0
    %361 = vmatprep.mubr.bf16.mxu0 0
    %362 = vmatmul.mubr.bf16.gmra.mrb[0].mxu0 %v172
    %v363 = vpop.f32.mrb[0].mxu0
    %v364 = vadd.f32 0.0, %v363
    %v365 = vpop.f32.mrb[0].mxu0
    %v366 = vpop.f32.mrb[0].mxu0
    %v367 = vadd.f32 0.0, %v366
    %v368 = vpop.f32.mrb[0].mxu0
    %369 = vmatprep.mubr.bf16.mxu0 0
    %370 = vmatmul.mubr.bf16.gmra.mrb[0].mxu0 %v173
    %v371 = vpop.f32.mrb[0].mxu0
    %v372 = vadd.f32 0.0, %v371
    %v373 = vpop.f32.mrb[0].mxu0
    %v374 = vpop.f32.mrb[0].mxu0
    %v375 = vadd.f32 0.0, %v374
    %v376 = vpop.f32.mrb[0].mxu0
    %377 = vmatprep.mubr.bf16.mxu0 0
    %378 = vmatmul.mubr.bf16.gmra.mrb[0].mxu0 %v174
    %v379 = vpop.f32.mrb[0].mxu0
    %v380 = vadd.f32 0.0, %v379
    %v381 = vpop.f32.mrb[0].mxu0
    %v382 = vpop.f32.mrb[0].mxu0
    %v383 = vadd.f32 0.0, %v382
    %v384 = vpop.f32.mrb[0].mxu0
    %385 = vmatprep.mubr.bf16.mxu0 0
    %386 = vmatmul.mubr.bf16.gmra.mrb[0].mxu0 %v175
    %v387 = vpop.f32.mrb[0].mxu0
    %v388 = vadd.f32 0.0, %v387
    %v389 = vpop.f32.mrb[0].mxu0
    %v390 = vpop.f32.mrb[0].mxu0
    %v391 = vadd.f32 0.0, %v390
    %v392 = vpop.f32.mrb[0].mxu0
    %393 = vmatprep.mubr.bf16.mxu0 0
    %394 = vmatmul.mubr.bf16.gmra.mrb[0].mxu0 %v176
    %v395 = vpop.f32.mrb[0].mxu0
    %v396 = vadd.f32 0.0, %v395
    %v397 = vpop.f32.mrb[0].mxu0
    %v398 = vpop.f32.mrb[0].mxu0
    %v399 = vadd.f32 0.0, %v398
    %v400 = vpop.f32.mrb[0].mxu0
    %401 = vdwg.mxu0
    %v402 = vpack.c.bf16 %v279, %v276
    %v403 = vpack.c.bf16 %v287, %v284
    %v404 = vpack.c.bf16 %v295, %v292
    %v405 = vpack.c.bf16 %v303, %v300
    %v406 = vpack.c.bf16 %v311, %v308
    %v407 = vpack.c.bf16 %v319, %v316
    %v408 = vpack.c.bf16 %v327, %v324
    %v409 = vpack.c.bf16 %v335, %v332
    %v410 = vpack.c.bf16 %v343, %v340
    %v411 = vpack.c.bf16 %v351, %v348
    %v412 = vpack.c.bf16 %v359, %v356
    %v413 = vpack.c.bf16 %v367, %v364
    %v414 = vpack.c.bf16 %v375, %v372
    %v415 = vpack.c.bf16 %v383, %v380
    %v416 = vpack.c.bf16 %v391, %v388
    %v417 = vpack.c.bf16 %v399, %v396
    %v434 = vunpack.c.l.b16 %v402
    %v435 = vunpack.c.h.b16 %v402
    %v436 = vunpack.c.l.b16 %v403
    %v437 = vunpack.c.h.b16 %v403
    %v438 = vunpack.c.l.b16 %v404
    %v439 = vunpack.c.h.b16 %v404
    %v440 = vunpack.c.l.b16 %v405
    %v441 = vunpack.c.h.b16 %v405
    %v442 = vunpack.c.l.b16 %v406
    %v443 = vunpack.c.h.b16 %v406
    %v444 = vunpack.c.l.b16 %v407
    %v445 = vunpack.c.h.b16 %v407
    %v446 = vunpack.c.l.b16 %v408
    %v447 = vunpack.c.h.b16 %v408
    %v448 = vunpack.c.l.b16 %v409
    %v449 = vunpack.c.h.b16 %v409
    %v450 = vunpack.c.l.b16 %v410
    %v451 = vunpack.c.h.b16 %v410
    %v452 = vunpack.c.l.b16 %v411
    %v453 = vunpack.c.h.b16 %v411
    %v454 = vunpack.c.l.b16 %v412
    %v455 = vunpack.c.h.b16 %v412
    %v456 = vunpack.c.l.b16 %v413
    %v457 = vunpack.c.h.b16 %v413
    %v458 = vunpack.c.l.b16 %v414
    %v459 = vunpack.c.h.b16 %v414
    %v460 = vunpack.c.l.b16 %v415
    %v461 = vunpack.c.h.b16 %v415
    %v462 = vunpack.c.l.b16 %v416
    %v463 = vunpack.c.h.b16 %v416
    %v464 = vunpack.c.l.b16 %v417
    %v465 = vunpack.c.h.b16 %v417
    %v466 = vpack.c.b16 %v434, %v434
    %v467 = vpack.c.b16 %v435, %v435
    %v468 = vpack.c.b16 %v436, %v436
    %v469 = vpack.c.b16 %v437, %v437
    %v470 = vpack.c.b16 %v438, %v438
    %v471 = vpack.c.b16 %v439, %v439
    %v472 = vpack.c.b16 %v440, %v440
    %v473 = vpack.c.b16 %v441, %v441
    %v474 = vpack.c.b16 %v442, %v442
    %v475 = vpack.c.b16 %v443, %v443
    %v476 = vpack.c.b16 %v444, %v444
    %v477 = vpack.c.b16 %v445, %v445
    %v478 = vpack.c.b16 %v446, %v446
    %v479 = vpack.c.b16 %v447, %v447
    %v480 = vpack.c.b16 %v448, %v448
    %v481 = vpack.c.b16 %v449, %v449
    %v482 = vpack.c.b16 %v450, %v450
    %v483 = vpack.c.b16 %v451, %v451
    %v484 = vpack.c.b16 %v452, %v452
    %v485 = vpack.c.b16 %v453, %v453
    %v486 = vpack.c.b16 %v454, %v454
    %v487 = vpack.c.b16 %v455, %v455
    %v488 = vpack.c.b16 %v456, %v456
    %v489 = vpack.c.b16 %v457, %v457
    %v490 = vpack.c.b16 %v458, %v458
    %v491 = vpack.c.b16 %v459, %v459
    %v492 = vpack.c.b16 %v460, %v460
    %v493 = vpack.c.b16 %v461, %v461
    %v494 = vpack.c.b16 %v462, %v462
    %v495 = vpack.c.b16 %v463, %v463
    %v496 = vpack.c.b16 %v464, %v464
    %v497 = vpack.c.b16 %v465, %v465
    %530 = vst [vmem:[#allocation7] sm:$0xf] %v466
    %531 = vst [vmem:[#allocation7 + $0x4] sm:$0xf] %v467
    %532 = vst [vmem:[#allocation7 + $0x8] sm:$0xf] %v468
    %533 = vst [vmem:[#allocation7 + $0xc] sm:$0xf] %v469
    %534 = vst [vmem:[#allocation7 + $0x10] sm:$0xf] %v470
    %535 = vst [vmem:[#allocation7 + $0x14] sm:$0xf] %v471
    %536 = vst [vmem:[#allocation7 + $0x18] sm:$0xf] %v472
    %537 = vst [vmem:[#allocation7 + $0x1c] sm:$0xf] %v473
    %538 = vst [vmem:[#allocation7 + $0x20] sm:$0xf] %v474
    %539 = vst [vmem:[#allocation7 + $0x24] sm:$0xf] %v475
    %540 = vst [vmem:[#allocation7 + $0x28] sm:$0xf] %v476
    %541 = vst [vmem:[#allocation7 + $0x2c] sm:$0xf] %v477
    %542 = vst [vmem:[#allocation7 + $0x30] sm:$0xf] %v478
    %543 = vst [vmem:[#allocation7 + $0x34] sm:$0xf] %v479
    %544 = vst [vmem:[#allocation7 + $0x38] sm:$0xf] %v480
    %545 = vst [vmem:[#allocation7 + $0x3c] sm:$0xf] %v481
    %546 = vst [vmem:[#allocation7 + $0x40] sm:$0xf] %v482
    %547 = vst [vmem:[#allocation7 + $0x44] sm:$0xf] %v483
    %548 = vst [vmem:[#allocation7 + $0x48] sm:$0xf] %v484
    %549 = vst [vmem:[#allocation7 + $0x4c] sm:$0xf] %v485
    %550 = vst [vmem:[#allocation7 + $0x50] sm:$0xf] %v486
    %551 = vst [vmem:[#allocation7 + $0x54] sm:$0xf] %v487
    %552 = vst [vmem:[#allocation7 + $0x58] sm:$0xf] %v488
    %553 = vst [vmem:[#allocation7 + $0x5c] sm:$0xf] %v489
    %554 = vst [vmem:[#allocation7 + $0x60] sm:$0xf] %v490
    %555 = vst [vmem:[#allocation7 + $0x64] sm:$0xf] %v491
    %556 = vst [vmem:[#allocation7 + $0x68] sm:$0xf] %v492
    %557 = vst [vmem:[#allocation7 + $0x6c] sm:$0xf] %v493
    %558 = vst [vmem:[#allocation7 + $0x70] sm:$0xf] %v494
    %559 = vst [vmem:[#allocation7 + $0x74] sm:$0xf] %v495
    %560 = vst [vmem:[#allocation7 + $0x78] sm:$0xf] %v496
    %561 = vst [vmem:[#allocation7 + $0x7c] sm:$0xf] %v497
    %v562 = vunpack.c.l.bf16 %v402
    %v563 = vunpack.c.h.bf16 %v402
    %v564 = vunpack.c.l.bf16 %v403
    %v565 = vunpack.c.h.bf16 %v403
    %v566 = vunpack.c.l.bf16 %v404
    %v567 = vunpack.c.h.bf16 %v404
    %v568 = vunpack.c.l.bf16 %v405
    %v569 = vunpack.c.h.bf16 %v405
    %v570 = vunpack.c.l.bf16 %v406
    %v571 = vunpack.c.h.bf16 %v406
    %v572 = vunpack.c.l.bf16 %v407
    %v573 = vunpack.c.h.bf16 %v407
    %v574 = vunpack.c.l.bf16 %v408
    %v575 = vunpack.c.h.bf16 %v408
    %v576 = vunpack.c.l.bf16 %v409
    %v577 = vunpack.c.h.bf16 %v409
    %v578 = vunpack.c.l.bf16 %v410
    %v579 = vunpack.c.h.bf16 %v410
    %v580 = vunpack.c.l.bf16 %v411
    %v581 = vunpack.c.h.bf16 %v411
    %v582 = vunpack.c.l.bf16 %v412
    %v583 = vunpack.c.h.bf16 %v412
    %v584 = vunpack.c.l.bf16 %v413
    %v585 = vunpack.c.h.bf16 %v413
    %v586 = vunpack.c.l.bf16 %v414
    %v587 = vunpack.c.h.bf16 %v414
    %v588 = vunpack.c.l.bf16 %v415
    %v589 = vunpack.c.h.bf16 %v415
    %v590 = vunpack.c.l.bf16 %v416
    %v591 = vunpack.c.h.bf16 %v416
    %v592 = vunpack.c.l.bf16 %v417
    %v593 = vunpack.c.h.bf16 %v417
    %v594 = vld [vmem:[#allocation8] sm:$0x3]
    %v595 = vadd.f32 %v562, %v563
    %v596 = vadd.f32 %v595, %v564
    %v597 = vadd.f32 %v596, %v565
    %v598 = vadd.f32 %v597, %v566
    %v599 = vadd.f32 %v598, %v567
    %v600 = vadd.f32 %v599, %v568
    %v601 = vadd.f32 %v600, %v569
    %v602 = vadd.f32 %v601, %v570
    %v603 = vadd.f32 %v602, %v571
    %v604 = vadd.f32 %v603, %v572
    %v605 = vadd.f32 %v604, %v573
    %v606 = vadd.f32 %v605, %v574
    %v607 = vadd.f32 %v606, %v575
    %v608 = vadd.f32 %v607, %v576
    %v609 = vadd.f32 %v608, %v577
    %v610 = vadd.f32 %v609, %v578
    %v611 = vadd.f32 %v610, %v579
    %v612 = vadd.f32 %v611, %v580
    %v613 = vadd.f32 %v612, %v581
    %v614 = vadd.f32 %v613, %v582
    %v615 = vadd.f32 %v614, %v583
    %v616 = vadd.f32 %v615, %v584
    %v617 = vadd.f32 %v616, %v585
    %v618 = vadd.f32 %v617, %v586
    %v619 = vadd.f32 %v618, %v587
    %v620 = vadd.f32 %v619, %v588
    %v621 = vadd.f32 %v620, %v589
    %v622 = vadd.f32 %v621, %v590
    %v623 = vadd.f32 %v622, %v591
    %v624 = vadd.f32 %v623, %v592
    %v625 = vadd.f32 %v624, %v593
    %v626 = vrot.slane %v625, 4
    %v627 = vadd.f32 %v625, %v626
    %v628 = vrot.slane %v627, 2
    %v629 = vadd.f32 %v627, %v628
    %v630 = vrot.slane %v629, 1
    %v631 = vadd.f32 %v629, %v630
    %v632 = vmul.f32 %v562, %v562
    %v633 = vmul.f32 %v563, %v563
    %v634 = vmul.f32 %v564, %v564
    %v635 = vmul.f32 %v565, %v565
    %v636 = vmul.f32 %v566, %v566
    %v637 = vmul.f32 %v567, %v567
    %v638 = vmul.f32 %v568, %v568
    %v639 = vmul.f32 %v569, %v569
    %v640 = vmul.f32 %v570, %v570
    %v641 = vmul.f32 %v571, %v571
    %v642 = vmul.f32 %v572, %v572
    %v643 = vmul.f32 %v573, %v573
    %v644 = vmul.f32 %v574, %v574
    %v645 = vmul.f32 %v575, %v575
    %v646 = vmul.f32 %v576, %v576
    %v647 = vmul.f32 %v577, %v577
    %v648 = vmul.f32 %v578, %v578
    %v649 = vmul.f32 %v579, %v579
    %v650 = vmul.f32 %v580, %v580
    %v651 = vmul.f32 %v581, %v581
    %v652 = vmul.f32 %v582, %v582
    %v653 = vmul.f32 %v583, %v583
    %v654 = vmul.f32 %v584, %v584
    %v655 = vmul.f32 %v585, %v585
    %v656 = vmul.f32 %v586, %v586
    %v657 = vmul.f32 %v587, %v587
    %v658 = vmul.f32 %v588, %v588
    %v659 = vmul.f32 %v589, %v589
    %v660 = vmul.f32 %v590, %v590
    %v661 = vmul.f32 %v591, %v591
    %v662 = vmul.f32 %v592, %v592
    %v663 = vmul.f32 %v593, %v593
    %v664 = vadd.f32 %v632, %v633
    %v665 = vadd.f32 %v664, %v634
    %v666 = vadd.f32 %v665, %v635
    %v667 = vadd.f32 %v666, %v636
    %v668 = vadd.f32 %v667, %v637
    %v669 = vadd.f32 %v668, %v638
    %v670 = vadd.f32 %v669, %v639
    %v671 = vadd.f32 %v670, %v640
    %v672 = vadd.f32 %v671, %v641
    %v673 = vadd.f32 %v672, %v642
    %v674 = vadd.f32 %v673, %v643
    %v675 = vadd.f32 %v674, %v644
    %v676 = vadd.f32 %v675, %v645
    %v677 = vadd.f32 %v676, %v646
    %v678 = vadd.f32 %v677, %v647
    %v679 = vadd.f32 %v678, %v648
    %v680 = vadd.f32 %v679, %v649
    %v681 = vadd.f32 %v680, %v650
    %v682 = vadd.f32 %v681, %v651
    %v683 = vadd.f32 %v682, %v652
    %v684 = vadd.f32 %v683, %v653
    %v685 = vadd.f32 %v684, %v654
    %v686 = vadd.f32 %v685, %v655
    %v687 = vadd.f32 %v686, %v656
    %v688 = vadd.f32 %v687, %v657
    %v689 = vadd.f32 %v688, %v658
    %v690 = vadd.f32 %v689, %v659
    %v691 = vadd.f32 %v690, %v660
    %v692 = vadd.f32 %v691, %v661
    %v693 = vadd.f32 %v692, %v662
    %v694 = vadd.f32 %v693, %v663
    %v695 = vrot.slane %v694, 4
    %v696 = vadd.f32 %v694, %v695
    %v697 = vrot.slane %v696, 2
    %v698 = vadd.f32 %v696, %v697
    %v699 = vrot.slane %v698, 1
    %v700 = vadd.f32 %v698, %v699
    %vm701 = vcmask 1040384
    %v702 = vsel %vm701, %v631, %v700
    %v703 = vadd.f32 %v594, %v702
    %704 = vst [vmem:[#allocation8] sm:$0x3] %v703
    // Predicated region
    $region22: #{tpu_custom_call.1} parent=1 // pred_check
      _
    $region23: #{tpu_custom_call.1} parent=1 // pred_check_branch
      %706 = sbr.rel (0) target = $region25
    $region24: #{tpu_custom_call.1} parent=1 // pred_region
      %s708 = ssub.s32 2048, 2048
      %709 = vsyncadd [#allocation4], %s708
      %s710 = sshll.u32 [#allocation7], 4
      %s711 = int_to_ptr.vmem [resolvable:$true] %s710
      %716 = dma.vmem_to_hbm [thread:$0]  %s711, 2048, %s2, [#allocation4], 64, 64, 4
    $region25: #{tpu_custom_call.1} parent=1 // pred_fallthru
      _
    // Predicated region
    $region26: #{tpu_custom_call.1} parent=1 // pred_check
      _
    $region27: #{tpu_custom_call.1} parent=1 // pred_check_branch
      %718 = sbr.rel (0) target = $region29
    $region28: #{tpu_custom_call.1} parent=1 // pred_region
      %s720 = ssub.s32 32, 32
      %721 = vsyncadd [#allocation9], %s720
      %s723 = sshll.u32 [#allocation8], 4
      %s724 = int_to_ptr.vmem [resolvable:$true] %s723
      %726 = dma.vmem_to_hbm [thread:$0]  %s724, 32, %s3, [#allocation9]
    $region29: #{tpu_custom_call.1} parent=1 // pred_fallthru
      _
    // Predicated region
    $region30: #{tpu_custom_call.1} parent=1 // pred_check
      _
    $region31: #{tpu_custom_call.1} parent=1 // pred_check_branch
      %728 = sbr.rel (0) target = $region33
    $region32: #{tpu_custom_call.1} parent=1 // pred_region
      %729 = dma.done [#allocation4], 2048
    $region33: #{tpu_custom_call.1} parent=1 // pred_fallthru
      _
    // Predicated region
    $region34: #{tpu_custom_call.1} parent=1 // pred_check
      _
    $region35: #{tpu_custom_call.1} parent=1 // pred_check_branch
      %731 = sbr.rel (0) target = $region37
    $region36: #{tpu_custom_call.1} parent=1 // pred_region
      %732 = dma.done [#allocation9], 32
    $region37: #{tpu_custom_call.1} parent=1 // pred_fallthru
      _
    %733 = vsyncpa [#allocation3], 1
    %734 = vsyncpa [#allocation6], 1
    %735 = vsyncpa [#allocation4], 1
    %736 = vsyncpa [#allocation9], 1

</llo_original>
